<compile_context>
chip_gen: v5e
topology: v5e:2x2
jax: 0.10.0
libtpu: 0.0.40
codegen_flags: <defaults>
</compile_context>

<pallas_src>
import jax
import jax.numpy as jnp
from jax.experimental import pallas as pl
from jax.experimental.pallas import tpu as pltpu


def _round_up(x, m):
    return ((x + m - 1) // m) * m


def _vmem_capacity_bytes():
    """Physical VMEM of the local TPU generation (fallback: v7x's 64 MiB)."""
    try:
        info = pltpu.get_tpu_info()
        cap = int(getattr(info, "vmem_capacity_bytes", 0))
        if cap > 0:
            return cap
    except Exception:
        pass
    return 64 << 20


def _make_kernel(mxu_dtype):
    """Kernel factory; mxu_dtype is the matmul input dtype (bf16 or f32)."""

    def kernel(adj_ref, xk_ref, out_ref, norm_ref):
        i = pl.program_id(1)               # row tile
        k = pl.program_id(2)               # contraction tile (last, "arbitrary")
        _, bm, bk = adj_ref.shape

        @pl.when(k == 0)
        def _init():
            out_ref[...] = jnp.zeros_like(out_ref)
            norm_ref[...] = jnp.zeros_like(norm_ref)

        adj_raw = adj_ref[...]             # (bb, bm, bk), storage dtype

        # Degree count: reduce straight off the storage dtype with an f32
        # accumulator (exact integer counts, no full-tile widen).
        norm_ref[...] += jnp.sum(adj_raw, axis=2, keepdims=True,
                                 dtype=jnp.float32)

        # MXU inputs: bf16 by default (no-op cast when stored bf16),
        # accumulation stays f32 via preferred_element_type.
        adj = adj_raw.astype(mxu_dtype)

        # Fold the "+ x" self term into the matmul: add I on the *global*
        # diagonal covered by this (i, k) tile (handles bm != bk).
        rows = jax.lax.broadcasted_iota(jnp.int32, (bm, bk), 0)
        cols = jax.lax.broadcasted_iota(jnp.int32, (bm, bk), 1)
        diag_off = k * bk - i * bm
        adj = adj + ((rows - cols) == diag_off).astype(mxu_dtype)

        xk = xk_ref[...].astype(mxu_dtype)   # no-op; x is stored in mxu_dtype

        # Accumulate directly into the resident f32 output block.
        out_ref[...] += jnp.einsum("bij,bjd->bid", adj, xk,
                                   preferred_element_type=jnp.float32)

        @pl.when(k == pl.num_programs(2) - 1)
        def _finalize():
            out_ref[...] *= pl.reciprocal(norm_ref[...] + 1.0, approx=False)

    return kernel


def message_passing(x, adj, *, adj_dtype=jnp.bfloat16, mxu_dtype=jnp.bfloat16,
                    fold_budget_bytes=32 << 20, slice_output=True):
    """x: [B, N, D], adj: [B, N, N] -> [B, N, D] float32.

    adj_dtype: storage dtype for the adjacency stream.  bf16 (default) and
      int8 are exact for 0/1 GGNN adjacency and shrink the dominant HBM
      stream 2x / 4x vs f32; pass None to keep adj in its input dtype
      (use for weighted adjacency that is not exactly representable).
    mxu_dtype: matmul input dtype.  bf16 (default) uses the native MXU path
      (accumulation stays f32); pass jnp.float32 for a bit-accurate path.
    """
    B, N, D = x.shape
    assert adj.shape == (B, N, N), (x.shape, adj.shape)

    mxu_dtype = jnp.dtype(mxu_dtype)
    adj_store = jnp.dtype(adj.dtype if adj_dtype is None else adj_dtype)
    adj_bytes = adj_store.itemsize
    x_bytes = mxu_dtype.itemsize
    out_bytes = 4                                        # f32 accumulation/output

    # Lane-dense feature dim (multiple of 128 -> unmasked vector stores).
    Dp = _round_up(D, 128)

    vmem_cap = _vmem_capacity_bytes()
    budget = int(vmem_cap * 0.6)        # tile-selection budget (Mosaic headroom)
    max_limit = int(vmem_cap * 0.8)     # ceiling for the scoped-VMEM request

    def need_bytes(bb, bm, bk):
        # double-buffered adj / x_k / out streams + lane-padded norm scratch
        per = bm * bk * adj_bytes + bk * Dp * x_bytes + bm * Dp * out_bytes
        return bb * (2 * per + bm * 128 * 4)

    # --- Row / contraction tiling (bm = bk, >= 128 for lane density). -------
    bm = bk = 128
    Np = _round_up(N, 128)
    for t in (1024, 512, 256, 128):
        Np_t = _round_up(N, t)
        if Np_t - N > max(N // 8, 128):      # limit zero-padding waste
            continue
        if need_bytes(1, t, t) <= budget:
            bm = bk = t
            Np = Np_t
            break
    else:
        # Very large Dp: keep bk lane-sized, shrink the row tile to fit VMEM.
        bk = 128
        Np = _round_up(N, 128)
        bm = 128
        while bm > 8 and need_bytes(1, bm, bk) > budget:
            bm //= 2
        # TODO(synk): for extreme D (x_k block alone > budget) add a D-tiling
        # grid axis instead of shrinking bm further.

    # --- Fold batch elements per grid step for small graphs (amortize the
    #     ~0.35us per-step overhead), keeping >= 2 "parallel" steps for v7x. --
    bb = 1
    fold_budget = min(budget, fold_budget_bytes)
    if Np == bm:
        for cand in range(2, B + 1):
            if (B % cand == 0 and (B // cand) >= 2
                    and need_bytes(cand, bm, bk) <= fold_budget):
                bb = cand

    # B == 1 and a single row tile would leave one v7x TensorCore idle:
    # split the row axis instead.
    if (B // bb) * (Np // bm) < 2 and (Np // bm) == 1 and bm >= 16:
        bm //= 2

    grid = (B // bb, Np // bm, Np // bk)

    # --- Pad (exact) and cast the operands. ---------------------------------
    x_p = x
    if Np != N or Dp != D:
        x_p = jnp.pad(x_p, ((0, 0), (0, Np - N), (0, Dp - D)))
    if x_p.dtype != mxu_dtype:
        x_p = x_p.astype(mxu_dtype)

    adj_p = adj
    if Np != N:
        adj_p = jnp.pad(adj_p, ((0, 0), (0, Np - N), (0, Np - N)))
    if adj_p.dtype != adj_store:
        adj_p = adj_p.astype(adj_store)

    # --- Scoped VMEM request sized from the actual working set. -------------
    need = need_bytes(bb, bm, bk)
    vmem_limit = int(min(max_limit, max(16 << 20, need + need // 4 + (2 << 20))))
    vmem_limit = int(max(vmem_limit, min(need, max_limit)))

    out_p = pl.pallas_call(
        _make_kernel(mxu_dtype),
        out_shape=jax.ShapeDtypeStruct((B, Np, Dp), jnp.float32),
        grid_spec=pltpu.PrefetchScalarGridSpec(
            num_scalar_prefetch=0,
            grid=grid,
            in_specs=[
                # adjacency tile: rows follow i, columns follow k
                pl.BlockSpec((bb, bm, bk), lambda b, i, k: (b, i, k)),
                # x contraction block (rows follow k)
                pl.BlockSpec((bb, bk, Dp), lambda b, i, k: (b, k, 0)),
            ],
            out_specs=pl.BlockSpec((bb, bm, Dp), lambda b, i, k: (b, i, 0)),
            scratch_shapes=[
                pltpu.VMEM((bb, bm, 1), jnp.float32),    # row-sum (degree) acc
            ],
        ),
        compiler_params=pltpu.CompilerParams(
            dimension_semantics=("parallel", "parallel", "arbitrary"),
            vmem_limit_bytes=vmem_limit,
        ),
    )(adj_p, x_p)

    if slice_output and (Np != N or Dp != D):
        # Note: this slice is a full extra read+write of the output; callers
        # that can consume a padded layout should pass slice_output=False.
        out_p = out_p[:, :N, :D]
    return out_p


def message_passing_ref(x, adj):
    norm = jnp.sum(adj, axis=2, keepdims=True) + 1.0
    return (jnp.einsum("bij,bjd->bid", adj, x) + x) / norm


if __name__ == "__main__":
    key = jax.random.PRNGKey(0)
    kx, ka = jax.random.split(key)

    B, N, D = 2, 16, 32
    x = jax.random.normal(kx, (B, N, D), dtype=jnp.float32)
    # Synthetic 0/1 adjacency (GGNN-style graph).
    adj = (jax.random.uniform(ka, (B, N, N)) > 0.5).astype(jnp.float32)

    ref = message_passing_ref(x, adj)

    # Exact path: adjacency kept in its input dtype, f32 MXU inputs.
    out_exact = jax.block_until_ready(
        message_passing(x, adj, adj_dtype=None, mxu_dtype=jnp.float32))
    assert out_exact.shape == (B, N, D)
    assert jnp.allclose(out_exact, ref, atol=1e-4, rtol=1e-4), float(
        jnp.max(jnp.abs(out_exact - ref)))

    # Fast default path: bf16 adjacency storage + bf16 MXU, f32 accumulation.
    out_fast = jax.block_until_ready(message_passing(x, adj))
    assert out_fast.shape == (B, N, D)
    assert jnp.allclose(out_fast, ref, atol=5e-2, rtol=5e-2), float(
        jnp.max(jnp.abs(out_fast - ref)))

    # int8 adjacency storage (exact 0/1 container, smallest HBM stream).
    out_i8 = jax.block_until_ready(
        message_passing(x, adj, adj_dtype=jnp.int8))
    assert jnp.allclose(out_i8, ref, atol=5e-2, rtol=5e-2), float(
        jnp.max(jnp.abs(out_i8 - ref)))

    print("KERNEL_OK")
</pallas_src>

<mosaic_0001>
module attributes {stable_mosaic.version = 11 : i64} {
  func.func @kernel(%arg0: i32, %arg1: i32, %arg2: i32, %arg3: memref<1x128x128xf32, #tpu.memory_space<vmem>>, %arg4: memref<1x128x128xf32, #tpu.memory_space<vmem>>, %arg5: memref<1x128x128xf32, #tpu.memory_space<vmem>>, %arg6: memref<1x128x1xf32, #tpu.memory_space<vmem>>) attributes {dimension_semantics = [#tpu.dimension_semantics<parallel>, #tpu.dimension_semantics<parallel>, #tpu.dimension_semantics<arbitrary>], iteration_bounds = array<i64: 2, 1, 1>, scalar_prefetch = 0 : i64, scratch_operands = 1 : i64, tpu.core_type = #tpu.core_type<tc>, window_params = [{transform_indices = @transform_0, window_bounds = array<i64: 1, 128, 128>}, {transform_indices = @transform_1, window_bounds = array<i64: 1, 128, 128>}, {transform_indices = @transform_2, window_bounds = array<i64: 1, 128, 128>}]} {
    %c0_i32 = arith.constant 0 : i32
    %0 = arith.cmpi eq, %arg2, %c0_i32 : i32
    %1 = arith.extui %0 : i1 to i32
    %c0_i32_0 = arith.constant 0 : i32
    %2 = arith.cmpi ne, %1, %c0_i32_0 : i32
    scf.if %2 {
      %cst_22 = arith.constant 0.000000e+00 : f32
      %29 = vector.broadcast %cst_22 : f32 to vector<1x128x128xf32>
      %c0_23 = arith.constant 0 : index
      %c0_24 = arith.constant 0 : index
      %c0_25 = arith.constant 0 : index
      %30 = vector.load %arg5[%c0_23, %c0_24, %c0_25] : memref<1x128x128xf32, #tpu.memory_space<vmem>>, vector<1x128x128xf32>
      tpu.vector_store %arg5[%c0_23, %c0_24, %c0_25], %29 {strides = array<i32>} : memref<1x128x128xf32, #tpu.memory_space<vmem>>, vector<1x128x128xf32>,
      %cst_26 = arith.constant 0.000000e+00 : f32
      %31 = vector.broadcast %cst_26 : f32 to vector<1x128x1xf32>
      %c0_27 = arith.constant 0 : index
      %c0_28 = arith.constant 0 : index
      %c0_29 = arith.constant 0 : index
      %32 = vector.load %arg6[%c0_27, %c0_28, %c0_29] : memref<1x128x1xf32, #tpu.memory_space<vmem>>, vector<1x128x1xf32>
      tpu.vector_store %arg6[%c0_27, %c0_28, %c0_29], %31 {strides = array<i32>} : memref<1x128x1xf32, #tpu.memory_space<vmem>>, vector<1x128x1xf32>,
    } else {
    }
    %c0 = arith.constant 0 : index
    %c0_1 = arith.constant 0 : index
    %c0_2 = arith.constant 0 : index
    %3 = vector.load %arg3[%c0, %c0_1, %c0_2] : memref<1x128x128xf32, #tpu.memory_space<vmem>>, vector<1x128x128xf32>
    %c0_3 = arith.constant 0 : index
    %c0_4 = arith.constant 0 : index
    %c0_5 = arith.constant 0 : index
    %4 = vector.load %arg6[%c0_3, %c0_4, %c0_5] : memref<1x128x1xf32, #tpu.memory_space<vmem>>, vector<1x128x1xf32>
    %cst = arith.constant dense<0.000000e+00> : vector<1x128xf32>
    %5 = vector.multi_reduction <add>, %3, %cst [2] : vector<1x128x128xf32> to vector<1x128xf32>
    %6 = vector.shape_cast %5 : vector<1x128xf32> to vector<1x128x1xf32>
    %7 = arith.addf %4, %6 : vector<1x128x1xf32>
    %c0_6 = arith.constant 0 : index
    %c0_7 = arith.constant 0 : index
    %c0_8 = arith.constant 0 : index
    %8 = vector.load %arg6[%c0_6, %c0_7, %c0_8] : memref<1x128x1xf32, #tpu.memory_space<vmem>>, vector<1x128x1xf32>
    tpu.vector_store %arg6[%c0_6, %c0_7, %c0_8], %7 {strides = array<i32>} : memref<1x128x1xf32, #tpu.memory_space<vmem>>, vector<1x128x1xf32>,
    %9 = tpu.iota {dimensions = array<i32: 0>} : vector<128x128xi32>
    %10 = tpu.iota {dimensions = array<i32: 1>} : vector<128x128xi32>
    %c128_i32 = arith.constant 128 : i32
    %11 = arith.muli %arg2, %c128_i32 : i32
    %c128_i32_9 = arith.constant 128 : i32
    %12 = arith.muli %arg1, %c128_i32_9 : i32
    %13 = arith.subi %11, %12 : i32
    %14 = arith.subi %9, %10 : vector<128x128xi32>
    %15 = vector.broadcast %13 : i32 to vector<128x128xi32>
    %16 = arith.cmpi eq, %14, %15 : vector<128x128xi32>
    %17 = arith.extui %16 : vector<128x128xi1> to vector<128x128xi32>
    %18 = arith.sitofp %17 : vector<128x128xi32> to vector<128x128xf32>
    %19 = vector.shape_cast %18 : vector<128x128xf32> to vector<1x128x128xf32>
    %20 = arith.addf %3, %19 : vector<1x128x128xf32>
    %c0_10 = arith.constant 0 : index
    %c0_11 = arith.constant 0 : index
    %c0_12 = arith.constant 0 : index
    %21 = vector.load %arg4[%c0_10, %c0_11, %c0_12] : memref<1x128x128xf32, #tpu.memory_space<vmem>>, vector<1x128x128xf32>
    %c0_13 = arith.constant 0 : index
    %c0_14 = arith.constant 0 : index
    %c0_15 = arith.constant 0 : index
    %22 = vector.load %arg5[%c0_13, %c0_14, %c0_15] : memref<1x128x128xf32, #tpu.memory_space<vmem>>, vector<1x128x128xf32>
    "tpu.trace_start"() <{level = 10 : i32, message = "bij,bjd->bid"}> : () -> ()
    %cst_16 = arith.constant dense<0.000000e+00> : vector<1x128x128xf32>
    %23 = tpu.matmul %20, %21, %cst_16 {dimension_numbers = #tpu.dot_dimension_numbers<[2], [1], [1], [2], [0, 0, 0, 1, 1, 2], [0], [0]>} : vector<1x128x128xf32>, vector<1x128x128xf32>, vector<1x128x128xf32> -> vector<1x128x128xf32>
    "tpu.trace_stop"() : () -> ()
    %24 = arith.addf %22, %23 : vector<1x128x128xf32>
    %c0_17 = arith.constant 0 : index
    %c0_18 = arith.constant 0 : index
    %c0_19 = arith.constant 0 : index
    %25 = vector.load %arg5[%c0_17, %c0_18, %c0_19] : memref<1x128x128xf32, #tpu.memory_space<vmem>>, vector<1x128x128xf32>
    tpu.vector_store %arg5[%c0_17, %c0_18, %c0_19], %24 {strides = array<i32>} : memref<1x128x128xf32, #tpu.memory_space<vmem>>, vector<1x128x128xf32>,
    %c0_i32_20 = arith.constant 0 : i32
    %26 = arith.cmpi eq, %arg2, %c0_i32_20 : i32
    %27 = arith.extui %26 : i1 to i32
    %c0_i32_21 = arith.constant 0 : i32
    %28 = arith.cmpi ne, %27, %c0_i32_21 : i32
    scf.if %28 {
      %c0_22 = arith.constant 0 : index
      %c0_23 = arith.constant 0 : index
      %c0_24 = arith.constant 0 : index
      %29 = vector.load %arg5[%c0_22, %c0_23, %c0_24] : memref<1x128x128xf32, #tpu.memory_space<vmem>>, vector<1x128x128xf32>
      %c0_25 = arith.constant 0 : index
      %c0_26 = arith.constant 0 : index
      %c0_27 = arith.constant 0 : index
      %30 = vector.load %arg6[%c0_25, %c0_26, %c0_27] : memref<1x128x1xf32, #tpu.memory_space<vmem>>, vector<1x128x1xf32>
      %cst_28 = arith.constant 1.000000e+00 : f32
      %31 = vector.broadcast %cst_28 : f32 to vector<1x128x1xf32>
      %32 = arith.addf %30, %31 : vector<1x128x1xf32>
      %33 = tpu.reciprocal %32 : vector<1x128x1xf32> -> vector<1x128x1xf32>
      %34 = vector.broadcast %33 : vector<1x128x1xf32> to vector<1x128x128xf32>
      %35 = arith.mulf %29, %34 : vector<1x128x128xf32>
      %c0_29 = arith.constant 0 : index
      %c0_30 = arith.constant 0 : index
      %c0_31 = arith.constant 0 : index
      %36 = vector.load %arg5[%c0_29, %c0_30, %c0_31] : memref<1x128x128xf32, #tpu.memory_space<vmem>>, vector<1x128x128xf32>
      tpu.vector_store %arg5[%c0_29, %c0_30, %c0_31], %35 {strides = array<i32>} : memref<1x128x128xf32, #tpu.memory_space<vmem>>, vector<1x128x128xf32>,
    } else {
    }
    return
  }
  func.func @transform_0(%arg0: i32, %arg1: i32, %arg2: i32) -> (i32, i32, i32) {
    %c0_i32 = arith.constant 0 : i32
    return %arg0, %arg1, %arg2 : i32, i32, i32
  }
  func.func @transform_1(%arg0: i32, %arg1: i32, %arg2: i32) -> (i32, i32, i32) {
    %c0_i32 = arith.constant 0 : i32
    %c0_i32_0 = arith.constant 0 : i32
    return %arg0, %arg2, %c0_i32 : i32, i32, i32
  }
  func.func @transform_2(%arg0: i32, %arg1: i32, %arg2: i32) -> (i32, i32, i32) {
    %c0_i32 = arith.constant 0 : i32
    %c0_i32_0 = arith.constant 0 : i32
    return %arg0, %arg1, %c0_i32 : i32, i32, i32
  }
}

</mosaic_0001>

<llo_original>
// kernel: tpu_custom_call.1
$region0: #{tpu_custom_call.1}
  #allocation0 [shape = 'u32[]', space=smem, size = 0x4, offset = 0x4, fixed_abs, tag = 'smem constant byte address 0x4 - core index']
  #allocation1 [shape = 'u32[72,128]{1,0:T(1,128)}', space=vmem, size = 0x9000, scoped, tag = 'internal scratch']
  #allocation2 [shape = 'f32[1,128,1]{2,1,0:T(8,128)}', space=vmem, size = 0x10000, scoped, tag = 'scratch operand']
  %s0 = inlined_call_operand.hbm [shape: f32[2,128,128], index: 0, kind: input, shape index: {}]
  %s1 = inlined_call_operand.hbm [shape: f32[2,128,128], index: 1, kind: input, shape index: {}]
  %s2 = inlined_call_operand.hbm [shape: f32[2,128,128], index: 2, kind: output, shape index: {}]
  %s3 = sld [smem:[#allocation0]]
  $region57: #{tpu_custom_call.1} parent=0
    _
  %s5 = ssub.s32 1, %s3
  %s6 = scalar_select 0, %s5, %s3
  $region1: #{tpu_custom_call.1} parent=0
    #allocation3 [shape = 'u8[131072]{0}', space=vmem, size = 0x20000, scoped, tag = 'input window, operand 0']
    #allocation4 [shape = 's32[2]{0}', space=sflag, size = 0x8, scoped, tag = 'scoped memory for tpu_custom_call.1']
    #allocation5 [shape = 's32[2]{0}', space=sflag, size = 0x8, scoped, tag = 'scoped memory for tpu_custom_call.1']
    #allocation6 [shape = 'u8[131072]{0}', space=vmem, size = 0x20000, scoped, tag = 'input window, operand 1']
    #allocation7 [shape = 's32[2]{0}', space=sflag, size = 0x8, scoped, tag = 'scoped memory for tpu_custom_call.1']
    #allocation8 [shape = 'u8[131072]{0}', space=vmem, size = 0x20000, scoped, tag = 'output window, operand 0']
    %7 = vsyncpa [#allocation4], 0
    %s8 = scalar_lea.sflag [#allocation4], 1
    %9 = vsyncpa %s8, 0
    %10 = vsyncpa [#allocation7], 0
    %s11 = scalar_lea.sflag [#allocation7], 1
    %12 = vsyncpa %s11, 0
    %13 = vsyncpa [#allocation5], 0
    %s14 = scalar_lea.sflag [#allocation5], 1
    %15 = vsyncpa %s14, 0
    loop: start=0, step=1, limit=4
    $region2: #{tpu_custom_call.1} parent=1 // loop_pre_header
      _
    $region3: #{tpu_custom_call.1} parent=1 // loop_header
      %s17 = sphi 0, %s21
      %p18 = scmp.ge.s32.totalorder %s17, 4
      %s24 = sphi 0, %s43
      %s25 = sphi 0, %s39
      %s26 = sphi 0, %s35
      %s27 = sphi 0, %s24
      %s28 = sphi 0, %s25
      %s29 = sphi 0, %s26
      %s30 = sphi 0, %s27
      %s31 = sphi 0, %s28
      %s32 = sphi 0, %s29
      %s50 = sphi 0, %s52
      %s53 = sphi 0, %s50
      %s54 = sphi 0, %s53
      %s70 = sphi 0, %s54
      %s78 = sphi 0, %s80
      %s81 = sphi 0, %s78
      %s82 = sphi 0, %s81
      %s98 = sphi 0, %s82
      %s106 = sphi 0, %s108
      %s109 = sphi 0, %s106
      %s110 = sphi 0, %s109
      %s126 = sphi 0, %s110
    $region4: #{tpu_custom_call.1} parent=1 // loop_header_branch
      %20 = sbr.rel (%p18) target = $region8
    $region5: #{tpu_custom_call.1} parent=1 // loop_body
      %s22 = ssub.s32 %s17, 1
      %s23 = ssub.s32 %s17, 2
      %s33 = sadd.s32 1, %s26
      %p34 = scmp.ge.s32.totalorder %s33, 1
      %s35 = scalar_select %p34, 0, %s33
      %s36 = sadd.s32 1, %s25
      %s37 = scalar_select %p34, %s36, %s25
      %p38 = scmp.ge.s32.totalorder %s37, 1
      %s39 = scalar_select %p38, 0, %s37
      %s40 = sadd.s32 1, %s24
      %s41 = scalar_select %p38, %s40, %s24
      %p42 = scmp.ge.s32.totalorder %s41, 2
      %s43 = scalar_select %p42, 0, %s41
      %s44 = ssub.s32 %s24, %s43
      %s45 = ssub.s32 %s25, %s39
      %s46 = sor.u32 %s44, %s45
      %s47 = ssub.s32 %s26, %s35
      %s48 = sor.u32 %s46, %s47
      %p49 = scmp.eq.s32.totalorder %s48, 0
      %s51 = sadd.s32 %s50, 1
      %s52 = scalar_select %p49, %s50, %s51
      %p55 = pneg %p49
      %p56 = scmp.eq.s32.totalorder %s17, 1
      %p57 = por %p55, %p56
      %p58 = scmp.ne.s32.totalorder %s50, %s53
      %p59 = scmp.eq.s32.totalorder %s17, 0
      %p60 = por %p58, %p59
      %p61 = scmp.ne.s32.totalorder %s50, %s53
      %p62 = scmp.eq.s32.totalorder %s22, 1
      %p63 = por %p61, %p62
      %p64 = scmp.ne.s32.totalorder %s53, %s54
      %p65 = scmp.eq.s32.totalorder %s22, 0
      %p66 = por %p64, %p65
      %p67 = scmp.ne.s32.totalorder %s53, %s54
      %p68 = scmp.eq.s32.totalorder %s23, 1
      %p69 = por %p67, %p68
      %p71 = scmp.ne.s32.totalorder %s54, %s70
      %p72 = scmp.eq.s32.totalorder %s23, 0
      %p73 = por %p71, %p72
      %s74 = ssub.s32 %s24, %s43
      %s75 = ssub.s32 %s26, %s35
      %s76 = sor.u32 %s74, %s75
      %p77 = scmp.eq.s32.totalorder %s76, 0
      %s79 = sadd.s32 %s78, 1
      %s80 = scalar_select %p77, %s78, %s79
      %p83 = pneg %p77
      %p84 = scmp.eq.s32.totalorder %s17, 1
      %p85 = por %p83, %p84
      %p86 = scmp.ne.s32.totalorder %s78, %s81
      %p87 = scmp.eq.s32.totalorder %s17, 0
      %p88 = por %p86, %p87
      %p89 = scmp.ne.s32.totalorder %s78, %s81
      %p90 = scmp.eq.s32.totalorder %s22, 1
      %p91 = por %p89, %p90
      %p92 = scmp.ne.s32.totalorder %s81, %s82
      %p93 = scmp.eq.s32.totalorder %s22, 0
      %p94 = por %p92, %p93
      %p95 = scmp.ne.s32.totalorder %s81, %s82
      %p96 = scmp.eq.s32.totalorder %s23, 1
      %p97 = por %p95, %p96
      %p99 = scmp.ne.s32.totalorder %s82, %s98
      %p100 = scmp.eq.s32.totalorder %s23, 0
      %p101 = por %p99, %p100
      %s102 = ssub.s32 %s24, %s43
      %s103 = ssub.s32 %s25, %s39
      %s104 = sor.u32 %s102, %s103
      %p105 = scmp.eq.s32.totalorder %s104, 0
      %s107 = sadd.s32 %s106, 1
      %s108 = scalar_select %p105, %s106, %s107
      %p111 = pneg %p105
      %p112 = scmp.eq.s32.totalorder %s17, 1
      %p113 = por %p111, %p112
      %p114 = scmp.ne.s32.totalorder %s106, %s109
      %p115 = scmp.eq.s32.totalorder %s17, 0
      %p116 = por %p114, %p115
      %p117 = scmp.ne.s32.totalorder %s106, %s109
      %p118 = scmp.eq.s32.totalorder %s22, 1
      %p119 = por %p117, %p118
      %p120 = scmp.ne.s32.totalorder %s109, %s110
      %p121 = scmp.eq.s32.totalorder %s22, 0
      %p122 = por %p120, %p121
      %p123 = scmp.ne.s32.totalorder %s109, %s110
      %p124 = scmp.eq.s32.totalorder %s23, 1
      %p125 = por %p123, %p124
      %p127 = scmp.ne.s32.totalorder %s110, %s126
      %p128 = scmp.eq.s32.totalorder %s23, 0
      %p129 = por %p127, %p128
      %p130 = scmp.le.s32.totalorder 1, %s17
      %p131 = scmp.lt.s32.totalorder %s17, 3
      %p132 = pnand %p130, %p131
      %p133 = pneg %p132
      // Predicated region
      $region9: #{tpu_custom_call.1} parent=5 // pred_check
        _
      $region10: #{tpu_custom_call.1} parent=5 // pred_check_branch
        %135 = sbr.rel (%p132) target = $region12
      $region11: #{tpu_custom_call.1} parent=5 // pred_region
        %s136 = ssub.s32 %s17, 1
      $region12: #{tpu_custom_call.1} parent=5 // pred_fallthru
        _
      %p137 = scmp.lt.s32.totalorder %s17, 2
      // Predicated region
      $region13: #{tpu_custom_call.1} parent=5 // pred_check
        %p138 = pneg %p137
      $region14: #{tpu_custom_call.1} parent=5 // pred_check_branch
        %140 = sbr.rel (%p138) target = $region16
      $region15: #{tpu_custom_call.1} parent=5 // pred_region
        // Predicated region
        $region17: #{tpu_custom_call.1} parent=15 // pred_check
          %p141 = pneg %p60
        $region18: #{tpu_custom_call.1} parent=15 // pred_check_branch
          %143 = sbr.rel (%p141) target = $region20
        $region19: #{tpu_custom_call.1} parent=15 // pred_region
          %s144 = sand.u32 %s50, 1
          %s145 = scalar_lea.sflag [#allocation4], %s144
          %s146 = sand.u32 %s50, 1
          %s147 = smul.addr %s146, 128
          %s148 = scalar_lea.vmem [#allocation3], %s147
          %s149 = smul.u32 16, %s25
          %151 = vsyncadd %s145, 0
          %s152 = sadd.s32 %s26, %s149
          %s153 = smul.addr %s24, 16
          %s154 = sadd.s32 %s152, %s153
          %s155 = smul.addr %s154, 8
          %s156 = scalar_lea.hbm %s0, %s155
          %s157 = sshll.u32 %s156, 4
          %s158 = int_to_ptr.hbm [resolvable:$true] %s157
          %s159 = sshll.u32 %s148, 4
          %s160 = int_to_ptr.vmem [resolvable:$true] %s159
          %165 = dma.hbm_to_vmem [thread:$0]  %s158, 2048, %s160, %s145, 128, 128, 8
        $region20: #{tpu_custom_call.1} parent=15 // pred_fallthru
          _
        // Predicated region
        $region21: #{tpu_custom_call.1} parent=15 // pred_check
          %p166 = pneg %p88
        $region22: #{tpu_custom_call.1} parent=15 // pred_check_branch
          %168 = sbr.rel (%p166) target = $region24
        $region23: #{tpu_custom_call.1} parent=15 // pred_region
          %s169 = sand.u32 %s78, 1
          %s170 = scalar_lea.sflag [#allocation7], %s169
          %s171 = sand.u32 %s78, 1
          %s172 = smul.addr %s171, 128
          %s173 = scalar_lea.vmem [#allocation6], %s172
          %s174 = smul.u32 16, %s26
          %176 = vsyncadd %s170, 0
          %s177 = smul.addr %s24, 16
          %s178 = sadd.s32 %s174, %s177
          %s179 = smul.addr %s178, 8
          %s180 = scalar_lea.hbm %s1, %s179
          %s181 = sshll.u32 %s180, 4
          %s182 = int_to_ptr.hbm [resolvable:$true] %s181
          %s183 = sshll.u32 %s173, 4
          %s184 = int_to_ptr.vmem [resolvable:$true] %s183
          %189 = dma.hbm_to_vmem [thread:$0]  %s182, 2048, %s184, %s170, 128, 128, 8
        $region24: #{tpu_custom_call.1} parent=15 // pred_fallthru
          _
      $region16: #{tpu_custom_call.1} parent=5 // pred_fallthru
        _
      %p190 = scmp.le.s32.totalorder 1, %s17
      %p191 = scmp.lt.s32.totalorder %s17, 3
      %p192 = pnand %p190, %p191
      %p193 = pneg %p192
      // Predicated region
      $region25: #{tpu_custom_call.1} parent=5 // pred_check
        _
      $region26: #{tpu_custom_call.1} parent=5 // pred_check_branch
        %195 = sbr.rel (%p192) target = $region28
      $region27: #{tpu_custom_call.1} parent=5 // pred_region
        %s196 = ssub.s32 %s17, 1
        %s197 = sand.u32 %s53, 1
        %s198 = scalar_lea.sflag [#allocation4], %s197
        %s199 = sand.u32 %s53, 1
        %s200 = smul.addr %s199, 128
        %s201 = scalar_lea.vmem [#allocation3], %s200
        // Predicated region
        $region29: #{tpu_custom_call.1} parent=27 // pred_check
          %p202 = pneg %p66
        $region30: #{tpu_custom_call.1} parent=27 // pred_check_branch
          %204 = sbr.rel (%p202) target = $region32
        $region31: #{tpu_custom_call.1} parent=27 // pred_region
          %206 = dma.done %s198, 2048
        $region32: #{tpu_custom_call.1} parent=27 // pred_fallthru
          _
        %s207 = sand.u32 %s81, 1
        %s208 = scalar_lea.sflag [#allocation7], %s207
        %s209 = sand.u32 %s81, 1
        %s210 = smul.addr %s209, 128
        %s211 = scalar_lea.vmem [#allocation6], %s210
        // Predicated region
        $region33: #{tpu_custom_call.1} parent=27 // pred_check
          %p212 = pneg %p94
        $region34: #{tpu_custom_call.1} parent=27 // pred_check_branch
          %214 = sbr.rel (%p212) target = $region36
        $region35: #{tpu_custom_call.1} parent=27 // pred_region
          %216 = dma.done %s208, 2048
        $region36: #{tpu_custom_call.1} parent=27 // pred_fallthru
          _
        %s217 = sand.u32 %s53, 1
        %s218 = scalar_lea.sflag [#allocation4], %s217
        %s219 = sand.u32 %s53, 1
        %s220 = smul.addr %s219, 128
        %s221 = scalar_lea.vmem [#allocation3], %s220
        %p222 = pneg %p66
        %p223 = pneg %p63
        %s224 = sand.u32 %s81, 1
        %s225 = scalar_lea.sflag [#allocation7], %s224
        %s226 = sand.u32 %s81, 1
        %s227 = smul.addr %s226, 128
        %s228 = scalar_lea.vmem [#allocation6], %s227
        %p229 = pneg %p94
        %p230 = pneg %p91
        %p231 = pneg %p122
        %p232 = pneg %p119
        %s233 = sand.u32 %s109, 1
        %s234 = scalar_lea.sflag [#allocation5], %s233
        %s235 = sand.u32 %s109, 1
        %s236 = smul.addr %s235, 128
        %s237 = scalar_lea.vmem [#allocation8], %s236
        %s238 = smul.u32 16, %s28
        %s239 = smul.u32 16, %s29
        %s240 = smul.u32 16, %s28
        %p241 = scmp.eq.s32.totalorder %s29, 0
        // Predicated region
        $region37: #{tpu_custom_call.1} parent=27 // pred_check
          %p242 = pneg %p241
        $region38: #{tpu_custom_call.1} parent=27 // pred_check_branch
          %244 = sbr.rel (%p242) target = $region40
        $region39: #{tpu_custom_call.1} parent=27 // pred_region
          %245 = vst [vmem:[%s237] sm:$0xff] 0.0
          %246 = vst [vmem:[%s237 + $0x8] sm:$0xff] 0.0
          %247 = vst [vmem:[%s237 + $0x10] sm:$0xff] 0.0
          %248 = vst [vmem:[%s237 + $0x18] sm:$0xff] 0.0
          %249 = vst [vmem:[%s237 + $0x20] sm:$0xff] 0.0
          %250 = vst [vmem:[%s237 + $0x28] sm:$0xff] 0.0
          %251 = vst [vmem:[%s237 + $0x30] sm:$0xff] 0.0
          %252 = vst [vmem:[%s237 + $0x38] sm:$0xff] 0.0
          %253 = vst [vmem:[%s237 + $0x40] sm:$0xff] 0.0
          %254 = vst [vmem:[%s237 + $0x48] sm:$0xff] 0.0
          %255 = vst [vmem:[%s237 + $0x50] sm:$0xff] 0.0
          %256 = vst [vmem:[%s237 + $0x58] sm:$0xff] 0.0
          %257 = vst [vmem:[%s237 + $0x60] sm:$0xff] 0.0
          %258 = vst [vmem:[%s237 + $0x68] sm:$0xff] 0.0
          %259 = vst [vmem:[%s237 + $0x70] sm:$0xff] 0.0
          %260 = vst [vmem:[%s237 + $0x78] sm:$0xff] 0.0
          %vm261 = vcmask 7168
          %262 = vst.msk [vmem:[#allocation2] sm:$0xff] %vm261, 0.0
          %263 = vst.msk [vmem:[#allocation2 + $0x8] sm:$0xff] %vm261, 0.0
          %264 = vst.msk [vmem:[#allocation2 + $0x10] sm:$0xff] %vm261, 0.0
          %265 = vst.msk [vmem:[#allocation2 + $0x18] sm:$0xff] %vm261, 0.0
          %266 = vst.msk [vmem:[#allocation2 + $0x20] sm:$0xff] %vm261, 0.0
          %267 = vst.msk [vmem:[#allocation2 + $0x28] sm:$0xff] %vm261, 0.0
          %268 = vst.msk [vmem:[#allocation2 + $0x30] sm:$0xff] %vm261, 0.0
          %269 = vst.msk [vmem:[#allocation2 + $0x38] sm:$0xff] %vm261, 0.0
          %270 = vst.msk [vmem:[#allocation2 + $0x40] sm:$0xff] %vm261, 0.0
          %271 = vst.msk [vmem:[#allocation2 + $0x48] sm:$0xff] %vm261, 0.0
          %272 = vst.msk [vmem:[#allocation2 + $0x50] sm:$0xff] %vm261, 0.0
          %273 = vst.msk [vmem:[#allocation2 + $0x58] sm:$0xff] %vm261, 0.0
          %274 = vst.msk [vmem:[#allocation2 + $0x60] sm:$0xff] %vm261, 0.0
          %275 = vst.msk [vmem:[#allocation2 + $0x68] sm:$0xff] %vm261, 0.0
          %276 = vst.msk [vmem:[#allocation2 + $0x70] sm:$0xff] %vm261, 0.0
          %277 = vst.msk [vmem:[#allocation2 + $0x78] sm:$0xff] %vm261, 0.0
        $region40: #{tpu_custom_call.1} parent=27 // pred_fallthru
          _
        %v278 = vld [vmem:[%s201] sm:$0xff]
        %v279 = vld [vmem:[%s201 + $0x8] sm:$0xff]
        %v280 = vld [vmem:[%s201 + $0x10] sm:$0xff]
        %v281 = vld [vmem:[%s201 + $0x18] sm:$0xff]
        %v282 = vld [vmem:[%s201 + $0x20] sm:$0xff]
        %v283 = vld [vmem:[%s201 + $0x28] sm:$0xff]
        %v284 = vld [vmem:[%s201 + $0x30] sm:$0xff]
        %v285 = vld [vmem:[%s201 + $0x38] sm:$0xff]
        %v286 = vld [vmem:[%s201 + $0x40] sm:$0xff]
        %v287 = vld [vmem:[%s201 + $0x48] sm:$0xff]
        %v288 = vld [vmem:[%s201 + $0x50] sm:$0xff]
        %v289 = vld [vmem:[%s201 + $0x58] sm:$0xff]
        %v290 = vld [vmem:[%s201 + $0x60] sm:$0xff]
        %v291 = vld [vmem:[%s201 + $0x68] sm:$0xff]
        %v292 = vld [vmem:[%s201 + $0x70] sm:$0xff]
        %v293 = vld [vmem:[%s201 + $0x78] sm:$0xff]
        %v294 = vld [vmem:[#allocation2] sm:$0xff]
        %v295 = vld [vmem:[#allocation2 + $0x8] sm:$0xff]
        %v296 = vld [vmem:[#allocation2 + $0x10] sm:$0xff]
        %v297 = vld [vmem:[#allocation2 + $0x18] sm:$0xff]
        %v298 = vld [vmem:[#allocation2 + $0x20] sm:$0xff]
        %v299 = vld [vmem:[#allocation2 + $0x28] sm:$0xff]
        %v300 = vld [vmem:[#allocation2 + $0x30] sm:$0xff]
        %v301 = vld [vmem:[#allocation2 + $0x38] sm:$0xff]
        %v302 = vld [vmem:[#allocation2 + $0x40] sm:$0xff]
        %v303 = vld [vmem:[#allocation2 + $0x48] sm:$0xff]
        %v304 = vld [vmem:[#allocation2 + $0x50] sm:$0xff]
        %v305 = vld [vmem:[#allocation2 + $0x58] sm:$0xff]
        %v306 = vld [vmem:[#allocation2 + $0x60] sm:$0xff]
        %v307 = vld [vmem:[#allocation2 + $0x68] sm:$0xff]
        %v308 = vld [vmem:[#allocation2 + $0x70] sm:$0xff]
        %v309 = vld [vmem:[#allocation2 + $0x78] sm:$0xff]
        %310 = vadd.xlane.f32.xlu0 %v278
        %v311 = vpop.xlane.xlu0 %310
        %312 = vadd.xlane.f32.xlu0 %v279
        %v313 = vpop.xlane.xlu0 %312
        %314 = vadd.xlane.f32.xlu0 %v280
        %v315 = vpop.xlane.xlu0 %314
        %316 = vadd.xlane.f32.xlu0 %v281
        %v317 = vpop.xlane.xlu0 %316
        %318 = vadd.xlane.f32.xlu0 %v282
        %v319 = vpop.xlane.xlu0 %318
        %320 = vadd.xlane.f32.xlu0 %v283
        %v321 = vpop.xlane.xlu0 %320
        %322 = vadd.xlane.f32.xlu0 %v284
        %v323 = vpop.xlane.xlu0 %322
        %324 = vadd.xlane.f32.xlu0 %v285
        %v325 = vpop.xlane.xlu0 %324
        %326 = vadd.xlane.f32.xlu0 %v286
        %v327 = vpop.xlane.xlu0 %326
        %328 = vadd.xlane.f32.xlu0 %v287
        %v329 = vpop.xlane.xlu0 %328
        %330 = vadd.xlane.f32.xlu0 %v288
        %v331 = vpop.xlane.xlu0 %330
        %332 = vadd.xlane.f32.xlu0 %v289
        %v333 = vpop.xlane.xlu0 %332
        %334 = vadd.xlane.f32.xlu0 %v290
        %v335 = vpop.xlane.xlu0 %334
        %336 = vadd.xlane.f32.xlu0 %v291
        %v337 = vpop.xlane.xlu0 %336
        %338 = vadd.xlane.f32.xlu0 %v292
        %v339 = vpop.xlane.xlu0 %338
        %340 = vadd.xlane.f32.xlu0 %v293
        %v341 = vpop.xlane.xlu0 %340
        %v342 = vadd.f32 %v294, %v311
        %v343 = vadd.f32 %v295, %v313
        %v344 = vadd.f32 %v296, %v315
        %v345 = vadd.f32 %v297, %v317
        %v346 = vadd.f32 %v298, %v319
        %v347 = vadd.f32 %v299, %v321
        %v348 = vadd.f32 %v300, %v323
        %v349 = vadd.f32 %v301, %v325
        %v350 = vadd.f32 %v302, %v327
        %v351 = vadd.f32 %v303, %v329
        %v352 = vadd.f32 %v304, %v331
        %v353 = vadd.f32 %v305, %v333
        %v354 = vadd.f32 %v306, %v335
        %v355 = vadd.f32 %v307, %v337
        %v356 = vadd.f32 %v308, %v339
        %v357 = vadd.f32 %v309, %v341
        %vm358 = vcmask 7168
        %359 = vst.msk [vmem:[#allocation2] sm:$0xff] %vm358, %v342
        %360 = vst.msk [vmem:[#allocation2 + $0x8] sm:$0xff] %vm358, %v343
        %361 = vst.msk [vmem:[#allocation2 + $0x10] sm:$0xff] %vm358, %v344
        %362 = vst.msk [vmem:[#allocation2 + $0x18] sm:$0xff] %vm358, %v345
        %363 = vst.msk [vmem:[#allocation2 + $0x20] sm:$0xff] %vm358, %v346
        %364 = vst.msk [vmem:[#allocation2 + $0x28] sm:$0xff] %vm358, %v347
        %365 = vst.msk [vmem:[#allocation2 + $0x30] sm:$0xff] %vm358, %v348
        %366 = vst.msk [vmem:[#allocation2 + $0x38] sm:$0xff] %vm358, %v349
        %367 = vst.msk [vmem:[#allocation2 + $0x40] sm:$0xff] %vm358, %v350
        %368 = vst.msk [vmem:[#allocation2 + $0x48] sm:$0xff] %vm358, %v351
        %369 = vst.msk [vmem:[#allocation2 + $0x50] sm:$0xff] %vm358, %v352
        %370 = vst.msk [vmem:[#allocation2 + $0x58] sm:$0xff] %vm358, %v353
        %371 = vst.msk [vmem:[#allocation2 + $0x60] sm:$0xff] %vm358, %v354
        %372 = vst.msk [vmem:[#allocation2 + $0x68] sm:$0xff] %vm358, %v355
        %373 = vst.msk [vmem:[#allocation2 + $0x70] sm:$0xff] %vm358, %v356
        %374 = vst.msk [vmem:[#allocation2 + $0x78] sm:$0xff] %vm358, %v357
        %v375 = vlaneseq
        %v376 = vshrl.u32 %v375, 7
        %v377 = vadd.s32 %v376, 8
        %v378 = vadd.s32 %v376, 16
        %v379 = vadd.s32 %v376, 24
        %v380 = vadd.s32 %v376, 32
        %v381 = vadd.s32 %v376, 40
        %v382 = vadd.s32 %v376, 48
        %v383 = vadd.s32 %v376, 56
        %v384 = vadd.s32 %v376, 64
        %v385 = vadd.s32 %v376, 72
        %v386 = vadd.s32 %v376, 80
        %v387 = vadd.s32 %v376, 88
        %v388 = vadd.s32 %v376, 96
        %v389 = vadd.s32 %v376, 104
        %v390 = vadd.s32 %v376, 112
        %v391 = vadd.s32 %v376, 120
        %v392 = vlaneseq
        %v393 = vand.u32 %v392, 127
        %s394 = smul.u32 %s29, 128
        %s395 = smul.u32 %s28, 128
        %s396 = ssub.s32 %s394, %s395
        %v397 = vsub.s32 %v376, %v393
        %v398 = vsub.s32 %v377, %v393
        %v399 = vsub.s32 %v378, %v393
        %v400 = vsub.s32 %v379, %v393
        %v401 = vsub.s32 %v380, %v393
        %v402 = vsub.s32 %v381, %v393
        %v403 = vsub.s32 %v382, %v393
        %v404 = vsub.s32 %v383, %v393
        %v405 = vsub.s32 %v384, %v393
        %v406 = vsub.s32 %v385, %v393
        %v407 = vsub.s32 %v386, %v393
        %v408 = vsub.s32 %v387, %v393
        %v409 = vsub.s32 %v388, %v393
        %v410 = vsub.s32 %v389, %v393
        %v411 = vsub.s32 %v390, %v393
        %v412 = vsub.s32 %v391, %v393
        %v413 = vstv %s396
        %vm414 = vcmp.eq.s32.totalorder %v397, %v413
        %vm415 = vcmp.eq.s32.totalorder %v398, %v413
        %vm416 = vcmp.eq.s32.totalorder %v399, %v413
        %vm417 = vcmp.eq.s32.totalorder %v400, %v413
        %vm418 = vcmp.eq.s32.totalorder %v401, %v413
        %vm419 = vcmp.eq.s32.totalorder %v402, %v413
        %vm420 = vcmp.eq.s32.totalorder %v403, %v413
        %vm421 = vcmp.eq.s32.totalorder %v404, %v413
        %vm422 = vcmp.eq.s32.totalorder %v405, %v413
        %vm423 = vcmp.eq.s32.totalorder %v406, %v413
        %vm424 = vcmp.eq.s32.totalorder %v407, %v413
        %vm425 = vcmp.eq.s32.totalorder %v408, %v413
        %vm426 = vcmp.eq.s32.totalorder %v409, %v413
        %vm427 = vcmp.eq.s32.totalorder %v410, %v413
        %vm428 = vcmp.eq.s32.totalorder %v411, %v413
        %vm429 = vcmp.eq.s32.totalorder %v412, %v413
        %v430 = vsel %vm414, 1, 0
        %v431 = vsel %vm415, 1, 0
        %v432 = vsel %vm416, 1, 0
        %v433 = vsel %vm417, 1, 0
        %v434 = vsel %vm418, 1, 0
        %v435 = vsel %vm419, 1, 0
        %v436 = vsel %vm420, 1, 0
        %v437 = vsel %vm421, 1, 0
        %v438 = vsel %vm422, 1, 0
        %v439 = vsel %vm423, 1, 0
        %v440 = vsel %vm424, 1, 0
        %v441 = vsel %vm425, 1, 0
        %v442 = vsel %vm426, 1, 0
        %v443 = vsel %vm427, 1, 0
        %v444 = vsel %vm428, 1, 0
        %v445 = vsel %vm429, 1, 0
        %v446 = vcvt.s32.f32 %v430
        %v447 = vcvt.s32.f32 %v431
        %v448 = vcvt.s32.f32 %v432
        %v449 = vcvt.s32.f32 %v433
        %v450 = vcvt.s32.f32 %v434
        %v451 = vcvt.s32.f32 %v435
        %v452 = vcvt.s32.f32 %v436
        %v453 = vcvt.s32.f32 %v437
        %v454 = vcvt.s32.f32 %v438
        %v455 = vcvt.s32.f32 %v439
        %v456 = vcvt.s32.f32 %v440
        %v457 = vcvt.s32.f32 %v441
        %v458 = vcvt.s32.f32 %v442
        %v459 = vcvt.s32.f32 %v443
        %v460 = vcvt.s32.f32 %v444
        %v461 = vcvt.s32.f32 %v445
        %v462 = vadd.f32 %v278, %v446
        %v463 = vadd.f32 %v279, %v447
        %v464 = vadd.f32 %v280, %v448
        %v465 = vadd.f32 %v281, %v449
        %v466 = vadd.f32 %v282, %v450
        %v467 = vadd.f32 %v283, %v451
        %v468 = vadd.f32 %v284, %v452
        %v469 = vadd.f32 %v285, %v453
        %v470 = vadd.f32 %v286, %v454
        %v471 = vadd.f32 %v287, %v455
        %v472 = vadd.f32 %v288, %v456
        %v473 = vadd.f32 %v289, %v457
        %v474 = vadd.f32 %v290, %v458
        %v475 = vadd.f32 %v291, %v459
        %v476 = vadd.f32 %v292, %v460
        %v477 = vadd.f32 %v293, %v461
        %v478 = vld [vmem:[%s211] sm:$0xff]
        %v479 = vld [vmem:[%s211 + $0x8] sm:$0xff]
        %v480 = vld [vmem:[%s211 + $0x10] sm:$0xff]
        %v481 = vld [vmem:[%s211 + $0x18] sm:$0xff]
        %v482 = vld [vmem:[%s211 + $0x20] sm:$0xff]
        %v483 = vld [vmem:[%s211 + $0x28] sm:$0xff]
        %v484 = vld [vmem:[%s211 + $0x30] sm:$0xff]
        %v485 = vld [vmem:[%s211 + $0x38] sm:$0xff]
        %v486 = vld [vmem:[%s211 + $0x40] sm:$0xff]
        %v487 = vld [vmem:[%s211 + $0x48] sm:$0xff]
        %v488 = vld [vmem:[%s211 + $0x50] sm:$0xff]
        %v489 = vld [vmem:[%s211 + $0x58] sm:$0xff]
        %v490 = vld [vmem:[%s211 + $0x60] sm:$0xff]
        %v491 = vld [vmem:[%s211 + $0x68] sm:$0xff]
        %v492 = vld [vmem:[%s211 + $0x70] sm:$0xff]
        %v493 = vld [vmem:[%s211 + $0x78] sm:$0xff]
        %v494 = vld [vmem:[%s237] sm:$0xff]
        %v495 = vld [vmem:[%s237 + $0x8] sm:$0xff]
        %v496 = vld [vmem:[%s237 + $0x10] sm:$0xff]
        %v497 = vld [vmem:[%s237 + $0x18] sm:$0xff]
        %v498 = vld [vmem:[%s237 + $0x20] sm:$0xff]
        %v499 = vld [vmem:[%s237 + $0x28] sm:$0xff]
        %v500 = vld [vmem:[%s237 + $0x30] sm:$0xff]
        %v501 = vld [vmem:[%s237 + $0x38] sm:$0xff]
        %v502 = vld [vmem:[%s237 + $0x40] sm:$0xff]
        %v503 = vld [vmem:[%s237 + $0x48] sm:$0xff]
        %v504 = vld [vmem:[%s237 + $0x50] sm:$0xff]
        %v505 = vld [vmem:[%s237 + $0x58] sm:$0xff]
        %v506 = vld [vmem:[%s237 + $0x60] sm:$0xff]
        %v507 = vld [vmem:[%s237 + $0x68] sm:$0xff]
        %v508 = vld [vmem:[%s237 + $0x70] sm:$0xff]
        %v509 = vld [vmem:[%s237 + $0x78] sm:$0xff]
        %510 = vmatpush.msra.mxu0 %v493
        %511 = vmatpush.msra.mxu0 %v492
        %512 = vmatpush.msra.mxu0 %v491
        %513 = vmatpush.msra.mxu0 %v490
        %514 = vmatpush.msra.mxu0 %v489
        %515 = vmatpush.msra.mxu0 %v488
        %516 = vmatpush.msra.mxu0 %v487
        %517 = vmatpush.msra.mxu0 %v486
        %518 = vmatpush.msra.mxu0 %v485
        %519 = vmatpush.msra.mxu0 %v484
        %520 = vmatpush.msra.mxu0 %v483
        %521 = vmatpush.msra.mxu0 %v482
        %522 = vmatpush.msra.mxu0 %v481
        %523 = vmatpush.msra.mxu0 %v480
        %524 = vmatpush.msra.mxu0 %v479
        %525 = vmatpush.msra.mxu0 %v478
        %526 = vmatmul.f32.gmra.mxu0 %v462
        %v527 = vpop.f32.mrf.mxu0
        %v528 = vadd.f32 0.0, %v527
        %529 = vmatmul.f32.gmra.mxu0 %v463
        %v530 = vpop.f32.mrf.mxu0
        %v531 = vadd.f32 0.0, %v530
        %532 = vmatmul.f32.gmra.mxu0 %v464
        %v533 = vpop.f32.mrf.mxu0
        %v534 = vadd.f32 0.0, %v533
        %535 = vmatmul.f32.gmra.mxu0 %v465
        %v536 = vpop.f32.mrf.mxu0
        %v537 = vadd.f32 0.0, %v536
        %538 = vmatmul.f32.gmra.mxu0 %v466
        %v539 = vpop.f32.mrf.mxu0
        %v540 = vadd.f32 0.0, %v539
        %541 = vmatmul.f32.gmra.mxu0 %v467
        %v542 = vpop.f32.mrf.mxu0
        %v543 = vadd.f32 0.0, %v542
        %544 = vmatmul.f32.gmra.mxu0 %v468
        %v545 = vpop.f32.mrf.mxu0
        %v546 = vadd.f32 0.0, %v545
        %547 = vmatmul.f32.gmra.mxu0 %v469
        %v548 = vpop.f32.mrf.mxu0
        %v549 = vadd.f32 0.0, %v548
        %550 = vmatmul.f32.gmra.mxu0 %v470
        %v551 = vpop.f32.mrf.mxu0
        %v552 = vadd.f32 0.0, %v551
        %553 = vmatmul.f32.gmra.mxu0 %v471
        %v554 = vpop.f32.mrf.mxu0
        %v555 = vadd.f32 0.0, %v554
        %556 = vmatmul.f32.gmra.mxu0 %v472
        %v557 = vpop.f32.mrf.mxu0
        %v558 = vadd.f32 0.0, %v557
        %559 = vmatmul.f32.gmra.mxu0 %v473
        %v560 = vpop.f32.mrf.mxu0
        %v561 = vadd.f32 0.0, %v560
        %562 = vmatmul.f32.gmra.mxu0 %v474
        %v563 = vpop.f32.mrf.mxu0
        %v564 = vadd.f32 0.0, %v563
        %565 = vmatmul.f32.gmra.mxu0 %v475
        %v566 = vpop.f32.mrf.mxu0
        %v567 = vadd.f32 0.0, %v566
        %568 = vmatmul.f32.gmra.mxu0 %v476
        %v569 = vpop.f32.mrf.mxu0
        %v570 = vadd.f32 0.0, %v569
        %571 = vmatmul.f32.gmra.mxu0 %v477
        %v572 = vpop.f32.mrf.mxu0
        %v573 = vadd.f32 0.0, %v572
        %574 = vdwg.mxu0
        %v575 = vadd.f32 %v494, %v528
        %v576 = vadd.f32 %v495, %v531
        %v577 = vadd.f32 %v496, %v534
        %v578 = vadd.f32 %v497, %v537
        %v579 = vadd.f32 %v498, %v540
        %v580 = vadd.f32 %v499, %v543
        %v581 = vadd.f32 %v500, %v546
        %v582 = vadd.f32 %v501, %v549
        %v583 = vadd.f32 %v502, %v552
        %v584 = vadd.f32 %v503, %v555
        %v585 = vadd.f32 %v504, %v558
        %v586 = vadd.f32 %v505, %v561
        %v587 = vadd.f32 %v506, %v564
        %v588 = vadd.f32 %v507, %v567
        %v589 = vadd.f32 %v508, %v570
        %v590 = vadd.f32 %v509, %v573
        %591 = vst [vmem:[%s237] sm:$0xff] %v575
        %592 = vst [vmem:[%s237 + $0x8] sm:$0xff] %v576
        %593 = vst [vmem:[%s237 + $0x10] sm:$0xff] %v577
        %594 = vst [vmem:[%s237 + $0x18] sm:$0xff] %v578
        %595 = vst [vmem:[%s237 + $0x20] sm:$0xff] %v579
        %596 = vst [vmem:[%s237 + $0x28] sm:$0xff] %v580
        %597 = vst [vmem:[%s237 + $0x30] sm:$0xff] %v581
        %598 = vst [vmem:[%s237 + $0x38] sm:$0xff] %v582
        %599 = vst [vmem:[%s237 + $0x40] sm:$0xff] %v583
        %600 = vst [vmem:[%s237 + $0x48] sm:$0xff] %v584
        %601 = vst [vmem:[%s237 + $0x50] sm:$0xff] %v585
        %602 = vst [vmem:[%s237 + $0x58] sm:$0xff] %v586
        %603 = vst [vmem:[%s237 + $0x60] sm:$0xff] %v587
        %604 = vst [vmem:[%s237 + $0x68] sm:$0xff] %v588
        %605 = vst [vmem:[%s237 + $0x70] sm:$0xff] %v589
        %606 = vst [vmem:[%s237 + $0x78] sm:$0xff] %v590
        // Predicated region
        $region41: #{tpu_custom_call.1} parent=27 // pred_check
          %p607 = pneg %p241
        $region42: #{tpu_custom_call.1} parent=27 // pred_check_branch
          %609 = sbr.rel (%p607) target = $region44
        $region43: #{tpu_custom_call.1} parent=27 // pred_region
          %v610 = vld [vmem:[%s237] sm:$0xff]
          %v611 = vld [vmem:[%s237 + $0x8] sm:$0xff]
          %v612 = vld [vmem:[%s237 + $0x10] sm:$0xff]
          %v613 = vld [vmem:[%s237 + $0x18] sm:$0xff]
          %v614 = vld [vmem:[%s237 + $0x20] sm:$0xff]
          %v615 = vld [vmem:[%s237 + $0x28] sm:$0xff]
          %v616 = vld [vmem:[%s237 + $0x30] sm:$0xff]
          %v617 = vld [vmem:[%s237 + $0x38] sm:$0xff]
          %v618 = vld [vmem:[%s237 + $0x40] sm:$0xff]
          %v619 = vld [vmem:[%s237 + $0x48] sm:$0xff]
          %v620 = vld [vmem:[%s237 + $0x50] sm:$0xff]
          %v621 = vld [vmem:[%s237 + $0x58] sm:$0xff]
          %v622 = vld [vmem:[%s237 + $0x60] sm:$0xff]
          %v623 = vld [vmem:[%s237 + $0x68] sm:$0xff]
          %v624 = vld [vmem:[%s237 + $0x70] sm:$0xff]
          %v625 = vld [vmem:[%s237 + $0x78] sm:$0xff]
          %v626 = vld [vmem:[#allocation2] sm:$0xff]
          %v627 = vld [vmem:[#allocation2 + $0x8] sm:$0xff]
          %v628 = vld [vmem:[#allocation2 + $0x10] sm:$0xff]
          %v629 = vld [vmem:[#allocation2 + $0x18] sm:$0xff]
          %v630 = vld [vmem:[#allocation2 + $0x20] sm:$0xff]
          %v631 = vld [vmem:[#allocation2 + $0x28] sm:$0xff]
          %v632 = vld [vmem:[#allocation2 + $0x30] sm:$0xff]
          %v633 = vld [vmem:[#allocation2 + $0x38] sm:$0xff]
          %v634 = vld [vmem:[#allocation2 + $0x40] sm:$0xff]
          %v635 = vld [vmem:[#allocation2 + $0x48] sm:$0xff]
          %v636 = vld [vmem:[#allocation2 + $0x50] sm:$0xff]
          %v637 = vld [vmem:[#allocation2 + $0x58] sm:$0xff]
          %v638 = vld [vmem:[#allocation2 + $0x60] sm:$0xff]
          %v639 = vld [vmem:[#allocation2 + $0x68] sm:$0xff]
          %v640 = vld [vmem:[#allocation2 + $0x70] sm:$0xff]
          %v641 = vld [vmem:[#allocation2 + $0x78] sm:$0xff]
          %v642 = vadd.f32 %v626, 1.0
          %v643 = vadd.f32 %v627, 1.0
          %v644 = vadd.f32 %v628, 1.0
          %v645 = vadd.f32 %v629, 1.0
          %v646 = vadd.f32 %v630, 1.0
          %v647 = vadd.f32 %v631, 1.0
          %v648 = vadd.f32 %v632, 1.0
          %v649 = vadd.f32 %v633, 1.0
          %v650 = vadd.f32 %v634, 1.0
          %v651 = vadd.f32 %v635, 1.0
          %v652 = vadd.f32 %v636, 1.0
          %v653 = vadd.f32 %v637, 1.0
          %v654 = vadd.f32 %v638, 1.0
          %v655 = vadd.f32 %v639, 1.0
          %v656 = vadd.f32 %v640, 1.0
          %v657 = vadd.f32 %v641, 1.0
          %v658 = vrcp.pop %v642
          %v659 = vmul.f32 %v642, %v658
          %v660 = vsub.f32 1.0, %v659
          %v661 = vmul.f32 %v658, %v660
          %v662 = vadd.f32 %v658, %v661
          %vm663 = vweird.f32 %v642
          %vm664 = vweird.f32 %v658
          %vm665 = vmor %vm663, %vm664
          %v666 = vsel %vm665, %v658, %v662
          %v667 = vand.u32 2147483647, %v642
          %vm668 = vcmp.eq.f32.partialorder %v667, 8.507059e+37
          %v669 = vand.u32 %v642, 2147483648
          %v670 = vor.u32 1.1754944e-38, %v669
          %v671 = vsel %vm668, %v670, %v666
          %v672 = vrcp.pop %v643
          %v673 = vmul.f32 %v643, %v672
          %v674 = vsub.f32 1.0, %v673
          %v675 = vmul.f32 %v672, %v674
          %v676 = vadd.f32 %v672, %v675
          %vm677 = vweird.f32 %v643
          %vm678 = vweird.f32 %v672
          %vm679 = vmor %vm677, %vm678
          %v680 = vsel %vm679, %v672, %v676
          %v681 = vand.u32 2147483647, %v643
          %vm682 = vcmp.eq.f32.partialorder %v681, 8.507059e+37
          %v683 = vand.u32 %v643, 2147483648
          %v684 = vor.u32 1.1754944e-38, %v683
          %v685 = vsel %vm682, %v684, %v680
          %v686 = vrcp.pop %v644
          %v687 = vmul.f32 %v644, %v686
          %v688 = vsub.f32 1.0, %v687
          %v689 = vmul.f32 %v686, %v688
          %v690 = vadd.f32 %v686, %v689
          %vm691 = vweird.f32 %v644
          %vm692 = vweird.f32 %v686
          %vm693 = vmor %vm691, %vm692
          %v694 = vsel %vm693, %v686, %v690
          %v695 = vand.u32 2147483647, %v644
          %vm696 = vcmp.eq.f32.partialorder %v695, 8.507059e+37
          %v697 = vand.u32 %v644, 2147483648
          %v698 = vor.u32 1.1754944e-38, %v697
          %v699 = vsel %vm696, %v698, %v694
          %v700 = vrcp.pop %v645
          %v701 = vmul.f32 %v645, %v700
          %v702 = vsub.f32 1.0, %v701
          %v703 = vmul.f32 %v700, %v702
          %v704 = vadd.f32 %v700, %v703
          %vm705 = vweird.f32 %v645
          %vm706 = vweird.f32 %v700
          %vm707 = vmor %vm705, %vm706
          %v708 = vsel %vm707, %v700, %v704
          %v709 = vand.u32 2147483647, %v645
          %vm710 = vcmp.eq.f32.partialorder %v709, 8.507059e+37
          %v711 = vand.u32 %v645, 2147483648
          %v712 = vor.u32 1.1754944e-38, %v711
          %v713 = vsel %vm710, %v712, %v708
          %v714 = vrcp.pop %v646
          %v715 = vmul.f32 %v646, %v714
          %v716 = vsub.f32 1.0, %v715
          %v717 = vmul.f32 %v714, %v716
          %v718 = vadd.f32 %v714, %v717
          %vm719 = vweird.f32 %v646
          %vm720 = vweird.f32 %v714
          %vm721 = vmor %vm719, %vm720
          %v722 = vsel %vm721, %v714, %v718
          %v723 = vand.u32 2147483647, %v646
          %vm724 = vcmp.eq.f32.partialorder %v723, 8.507059e+37
          %v725 = vand.u32 %v646, 2147483648
          %v726 = vor.u32 1.1754944e-38, %v725
          %v727 = vsel %vm724, %v726, %v722
          %v728 = vrcp.pop %v647
          %v729 = vmul.f32 %v647, %v728
          %v730 = vsub.f32 1.0, %v729
          %v731 = vmul.f32 %v728, %v730
          %v732 = vadd.f32 %v728, %v731
          %vm733 = vweird.f32 %v647
          %vm734 = vweird.f32 %v728
          %vm735 = vmor %vm733, %vm734
          %v736 = vsel %vm735, %v728, %v732
          %v737 = vand.u32 2147483647, %v647
          %vm738 = vcmp.eq.f32.partialorder %v737, 8.507059e+37
          %v739 = vand.u32 %v647, 2147483648
          %v740 = vor.u32 1.1754944e-38, %v739
          %v741 = vsel %vm738, %v740, %v736
          %v742 = vrcp.pop %v648
          %v743 = vmul.f32 %v648, %v742
          %v744 = vsub.f32 1.0, %v743
          %v745 = vmul.f32 %v742, %v744
          %v746 = vadd.f32 %v742, %v745
          %vm747 = vweird.f32 %v648
          %vm748 = vweird.f32 %v742
          %vm749 = vmor %vm747, %vm748
          %v750 = vsel %vm749, %v742, %v746
          %v751 = vand.u32 2147483647, %v648
          %vm752 = vcmp.eq.f32.partialorder %v751, 8.507059e+37
          %v753 = vand.u32 %v648, 2147483648
          %v754 = vor.u32 1.1754944e-38, %v753
          %v755 = vsel %vm752, %v754, %v750
          %v756 = vrcp.pop %v649
          %v757 = vmul.f32 %v649, %v756
          %v758 = vsub.f32 1.0, %v757
          %v759 = vmul.f32 %v756, %v758
          %v760 = vadd.f32 %v756, %v759
          %vm761 = vweird.f32 %v649
          %vm762 = vweird.f32 %v756
          %vm763 = vmor %vm761, %vm762
          %v764 = vsel %vm763, %v756, %v760
          %v765 = vand.u32 2147483647, %v649
          %vm766 = vcmp.eq.f32.partialorder %v765, 8.507059e+37
          %v767 = vand.u32 %v649, 2147483648
          %v768 = vor.u32 1.1754944e-38, %v767
          %v769 = vsel %vm766, %v768, %v764
          %v770 = vrcp.pop %v650
          %v771 = vmul.f32 %v650, %v770
          %v772 = vsub.f32 1.0, %v771
          %v773 = vmul.f32 %v770, %v772
          %v774 = vadd.f32 %v770, %v773
          %vm775 = vweird.f32 %v650
          %vm776 = vweird.f32 %v770
          %vm777 = vmor %vm775, %vm776
          %v778 = vsel %vm777, %v770, %v774
          %v779 = vand.u32 2147483647, %v650
          %vm780 = vcmp.eq.f32.partialorder %v779, 8.507059e+37
          %v781 = vand.u32 %v650, 2147483648
          %v782 = vor.u32 1.1754944e-38, %v781
          %v783 = vsel %vm780, %v782, %v778
          %v784 = vrcp.pop %v651
          %v785 = vmul.f32 %v651, %v784
          %v786 = vsub.f32 1.0, %v785
          %v787 = vmul.f32 %v784, %v786
          %v788 = vadd.f32 %v784, %v787
          %vm789 = vweird.f32 %v651
          %vm790 = vweird.f32 %v784
          %vm791 = vmor %vm789, %vm790
          %v792 = vsel %vm791, %v784, %v788
          %v793 = vand.u32 2147483647, %v651
          %vm794 = vcmp.eq.f32.partialorder %v793, 8.507059e+37
          %v795 = vand.u32 %v651, 2147483648
          %v796 = vor.u32 1.1754944e-38, %v795
          %v797 = vsel %vm794, %v796, %v792
          %v798 = vrcp.pop %v652
          %v799 = vmul.f32 %v652, %v798
          %v800 = vsub.f32 1.0, %v799
          %v801 = vmul.f32 %v798, %v800
          %v802 = vadd.f32 %v798, %v801
          %vm803 = vweird.f32 %v652
          %vm804 = vweird.f32 %v798
          %vm805 = vmor %vm803, %vm804
          %v806 = vsel %vm805, %v798, %v802
          %v807 = vand.u32 2147483647, %v652
          %vm808 = vcmp.eq.f32.partialorder %v807, 8.507059e+37
          %v809 = vand.u32 %v652, 2147483648
          %v810 = vor.u32 1.1754944e-38, %v809
          %v811 = vsel %vm808, %v810, %v806
          %v812 = vrcp.pop %v653
          %v813 = vmul.f32 %v653, %v812
          %v814 = vsub.f32 1.0, %v813
          %v815 = vmul.f32 %v812, %v814
          %v816 = vadd.f32 %v812, %v815
          %vm817 = vweird.f32 %v653
          %vm818 = vweird.f32 %v812
          %vm819 = vmor %vm817, %vm818
          %v820 = vsel %vm819, %v812, %v816
          %v821 = vand.u32 2147483647, %v653
          %vm822 = vcmp.eq.f32.partialorder %v821, 8.507059e+37
          %v823 = vand.u32 %v653, 2147483648
          %v824 = vor.u32 1.1754944e-38, %v823
          %v825 = vsel %vm822, %v824, %v820
          %v826 = vrcp.pop %v654
          %v827 = vmul.f32 %v654, %v826
          %v828 = vsub.f32 1.0, %v827
          %v829 = vmul.f32 %v826, %v828
          %v830 = vadd.f32 %v826, %v829
          %vm831 = vweird.f32 %v654
          %vm832 = vweird.f32 %v826
          %vm833 = vmor %vm831, %vm832
          %v834 = vsel %vm833, %v826, %v830
          %v835 = vand.u32 2147483647, %v654
          %vm836 = vcmp.eq.f32.partialorder %v835, 8.507059e+37
          %v837 = vand.u32 %v654, 2147483648
          %v838 = vor.u32 1.1754944e-38, %v837
          %v839 = vsel %vm836, %v838, %v834
          %v840 = vrcp.pop %v655
          %v841 = vmul.f32 %v655, %v840
          %v842 = vsub.f32 1.0, %v841
          %v843 = vmul.f32 %v840, %v842
          %v844 = vadd.f32 %v840, %v843
          %vm845 = vweird.f32 %v655
          %vm846 = vweird.f32 %v840
          %vm847 = vmor %vm845, %vm846
          %v848 = vsel %vm847, %v840, %v844
          %v849 = vand.u32 2147483647, %v655
          %vm850 = vcmp.eq.f32.partialorder %v849, 8.507059e+37
          %v851 = vand.u32 %v655, 2147483648
          %v852 = vor.u32 1.1754944e-38, %v851
          %v853 = vsel %vm850, %v852, %v848
          %v854 = vrcp.pop %v656
          %v855 = vmul.f32 %v656, %v854
          %v856 = vsub.f32 1.0, %v855
          %v857 = vmul.f32 %v854, %v856
          %v858 = vadd.f32 %v854, %v857
          %vm859 = vweird.f32 %v656
          %vm860 = vweird.f32 %v854
          %vm861 = vmor %vm859, %vm860
          %v862 = vsel %vm861, %v854, %v858
          %v863 = vand.u32 2147483647, %v656
          %vm864 = vcmp.eq.f32.partialorder %v863, 8.507059e+37
          %v865 = vand.u32 %v656, 2147483648
          %v866 = vor.u32 1.1754944e-38, %v865
          %v867 = vsel %vm864, %v866, %v862
          %v868 = vrcp.pop %v657
          %v869 = vmul.f32 %v657, %v868
          %v870 = vsub.f32 1.0, %v869
          %v871 = vmul.f32 %v868, %v870
          %v872 = vadd.f32 %v868, %v871
          %vm873 = vweird.f32 %v657
          %vm874 = vweird.f32 %v868
          %vm875 = vmor %vm873, %vm874
          %v876 = vsel %vm875, %v868, %v872
          %v877 = vand.u32 2147483647, %v657
          %vm878 = vcmp.eq.f32.partialorder %v877, 8.507059e+37
          %v879 = vand.u32 %v657, 2147483648
          %v880 = vor.u32 1.1754944e-38, %v879
          %v881 = vsel %vm878, %v880, %v876
          %883 = vset.pattern.permute.xlu0 0
          %884 = vperm.xlu0 %883, %v671
          %v885 = vpop.permute.xlu0 %884
          %888 = vset.pattern.permute.xlu0 0
          %889 = vperm.xlu0 %888, %v685
          %v890 = vpop.permute.xlu0 %889
          %893 = vset.pattern.permute.xlu0 0
          %894 = vperm.xlu0 %893, %v699
          %v895 = vpop.permute.xlu0 %894
          %898 = vset.pattern.permute.xlu0 0
          %899 = vperm.xlu0 %898, %v713
          %v900 = vpop.permute.xlu0 %899
          %903 = vset.pattern.permute.xlu0 0
          %904 = vperm.xlu0 %903, %v727
          %v905 = vpop.permute.xlu0 %904
          %908 = vset.pattern.permute.xlu0 0
          %909 = vperm.xlu0 %908, %v741
          %v910 = vpop.permute.xlu0 %909
          %913 = vset.pattern.permute.xlu0 0
          %914 = vperm.xlu0 %913, %v755
          %v915 = vpop.permute.xlu0 %914
          %918 = vset.pattern.permute.xlu0 0
          %919 = vperm.xlu0 %918, %v769
          %v920 = vpop.permute.xlu0 %919
          %923 = vset.pattern.permute.xlu0 0
          %924 = vperm.xlu0 %923, %v783
          %v925 = vpop.permute.xlu0 %924
          %928 = vset.pattern.permute.xlu0 0
          %929 = vperm.xlu0 %928, %v797
          %v930 = vpop.permute.xlu0 %929
          %933 = vset.pattern.permute.xlu0 0
          %934 = vperm.xlu0 %933, %v811
          %v935 = vpop.permute.xlu0 %934
          %938 = vset.pattern.permute.xlu0 0
          %939 = vperm.xlu0 %938, %v825
          %v940 = vpop.permute.xlu0 %939
          %943 = vset.pattern.permute.xlu0 0
          %944 = vperm.xlu0 %943, %v839
          %v945 = vpop.permute.xlu0 %944
          %948 = vset.pattern.permute.xlu0 0
          %949 = vperm.xlu0 %948, %v853
          %v950 = vpop.permute.xlu0 %949
          %953 = vset.pattern.permute.xlu0 0
          %954 = vperm.xlu0 %953, %v867
          %v955 = vpop.permute.xlu0 %954
          %958 = vset.pattern.permute.xlu0 0
          %959 = vperm.xlu0 %958, %v881
          %v960 = vpop.permute.xlu0 %959
          %v962 = vmul.f32 %v610, %v885
          %v963 = vmul.f32 %v611, %v890
          %v964 = vmul.f32 %v612, %v895
          %v965 = vmul.f32 %v613, %v900
          %v966 = vmul.f32 %v614, %v905
          %v967 = vmul.f32 %v615, %v910
          %v968 = vmul.f32 %v616, %v915
          %v969 = vmul.f32 %v617, %v920
          %v970 = vmul.f32 %v618, %v925
          %v971 = vmul.f32 %v619, %v930
          %v972 = vmul.f32 %v620, %v935
          %v973 = vmul.f32 %v621, %v940
          %v974 = vmul.f32 %v622, %v945
          %v975 = vmul.f32 %v623, %v950
          %v976 = vmul.f32 %v624, %v955
          %v977 = vmul.f32 %v625, %v960
          %978 = vst [vmem:[%s237] sm:$0xff] %v962
          %979 = vst [vmem:[%s237 + $0x8] sm:$0xff] %v963
          %980 = vst [vmem:[%s237 + $0x10] sm:$0xff] %v964
          %981 = vst [vmem:[%s237 + $0x18] sm:$0xff] %v965
          %982 = vst [vmem:[%s237 + $0x20] sm:$0xff] %v966
          %983 = vst [vmem:[%s237 + $0x28] sm:$0xff] %v967
          %984 = vst [vmem:[%s237 + $0x30] sm:$0xff] %v968
          %985 = vst [vmem:[%s237 + $0x38] sm:$0xff] %v969
          %986 = vst [vmem:[%s237 + $0x40] sm:$0xff] %v970
          %987 = vst [vmem:[%s237 + $0x48] sm:$0xff] %v971
          %988 = vst [vmem:[%s237 + $0x50] sm:$0xff] %v972
          %989 = vst [vmem:[%s237 + $0x58] sm:$0xff] %v973
          %990 = vst [vmem:[%s237 + $0x60] sm:$0xff] %v974
          %991 = vst [vmem:[%s237 + $0x68] sm:$0xff] %v975
          %992 = vst [vmem:[%s237 + $0x70] sm:$0xff] %v976
          %993 = vst [vmem:[%s237 + $0x78] sm:$0xff] %v977
        $region44: #{tpu_custom_call.1} parent=27 // pred_fallthru
          _
        %s994 = sand.u32 %s109, 1
        %s995 = scalar_lea.sflag [#allocation5], %s994
        %s996 = sand.u32 %s109, 1
        %s997 = smul.addr %s996, 128
        %s998 = scalar_lea.vmem [#allocation8], %s997
        // Predicated region
        $region45: #{tpu_custom_call.1} parent=27 // pred_check
          %p999 = pneg %p119
        $region46: #{tpu_custom_call.1} parent=27 // pred_check_branch
          %1001 = sbr.rel (%p999) target = $region48
        $region47: #{tpu_custom_call.1} parent=27 // pred_region
          %s1002 = smul.u32 16, %s28
          %1004 = vsyncadd %s995, 0
          %s1005 = smul.addr %s27, 16
          %s1006 = sadd.s32 %s1002, %s1005
          %s1007 = smul.addr %s1006, 8
          %s1008 = scalar_lea.hbm %s2, %s1007
          %s1009 = sshll.u32 %s998, 4
          %s1010 = int_to_ptr.vmem [resolvable:$true] %s1009
          %s1011 = sshll.u32 %s1008, 4
          %s1012 = int_to_ptr.hbm [resolvable:$true] %s1011
          %1017 = dma.vmem_to_hbm [thread:$0]  %s1010, 2048, %s1012, %s995, 128, 128, 8
        $region48: #{tpu_custom_call.1} parent=27 // pred_fallthru
          _
      $region28: #{tpu_custom_call.1} parent=5 // pred_fallthru
        _
      %p1018 = scmp.le.s32.totalorder 2, %s17
      // Predicated region
      $region49: #{tpu_custom_call.1} parent=5 // pred_check
        %p1019 = pneg %p1018
      $region50: #{tpu_custom_call.1} parent=5 // pred_check_branch
        %1021 = sbr.rel (%p1019) target = $region52
      $region51: #{tpu_custom_call.1} parent=5 // pred_region
        %s1022 = ssub.s32 %s17, 2
        // Predicated region
        $region53: #{tpu_custom_call.1} parent=51 // pred_check
          %p1023 = pneg %p125
        $region54: #{tpu_custom_call.1} parent=51 // pred_check_branch
          %1025 = sbr.rel (%p1023) target = $region56
        $region55: #{tpu_custom_call.1} parent=51 // pred_region
          %s1026 = sand.u32 %s110, 1
          %s1027 = scalar_lea.sflag [#allocation5], %s1026
          %s1028 = sand.u32 %s110, 1
          %s1029 = smul.addr %s1028, 128
          %s1030 = scalar_lea.vmem [#allocation8], %s1029
          %1032 = dma.done %s1027, 2048
        $region56: #{tpu_custom_call.1} parent=51 // pred_fallthru
          _
      $region52: #{tpu_custom_call.1} parent=5 // pred_fallthru
        _
    $region6: #{tpu_custom_call.1} parent=1 // loop_footer
      %s21 = sadd.s32 1, %s17
    $region7: #{tpu_custom_call.1} parent=1 // loop_footer_branch
      %16 = sbr.rel target = $region3
    $region8: #{tpu_custom_call.1} parent=1 // loop_exit
      _
    %1033 = vsyncpa [#allocation4], 1
    %s1034 = scalar_lea.sflag [#allocation4], 1
    %1035 = vsyncpa %s1034, 1
    %1036 = vsyncpa [#allocation7], 1
    %s1037 = scalar_lea.sflag [#allocation7], 1
    %1038 = vsyncpa %s1037, 1
    %1039 = vsyncpa [#allocation5], 1
    %s1040 = scalar_lea.sflag [#allocation5], 1
    %1041 = vsyncpa %s1040, 1

</llo_original>
